<compile_context>
chip_gen: v7x
topology: tpu7x:2x2x1
jax: 0.10.0
libtpu: 0.0.40
codegen_flags: <defaults>
</compile_context>

<pallas_src>
import functools

import jax
import jax.numpy as jnp
from jax import lax
from jax.experimental import pallas as pl
from jax.experimental.pallas import tpu as pltpu


def ntm_write_head_kernel(par_ref, wpre_ref, mem0_ref, w_out_ref, mem_out_ref,
                          w_state, *, M, N, TT):
    c = pl.program_id(0)

    @pl.when(c == 0)
    def _init():
        # Seed the resident batched memory and the recurrent write-weight state.
        mem_out_ref[...] = mem0_ref[...]
        w_state[...] = wpre_ref[...]

    def step(tt_i, carry):
        p = par_ref[tt_i]            # (B, P)  pre-activated, packed parameters
        mem = mem_out_ref[...]       # (B, M, N)  batched memory, N on lanes
        w_prev = w_state[...]        # (B, N)

        # ---- packed-parameter lane slices (all M-vectors 32-aligned) ----
        k     = p[:, 0:M]                      # key (no activation)
        e     = p[:, M:2 * M]                  # sigmoid already applied
        a     = p[:, 2 * M:3 * M]              # add vector (no activation)
        s0    = p[:, 3 * M:3 * M + 1]          # softmax(s) already applied
        s1    = p[:, 3 * M + 1:3 * M + 2]
        s2    = p[:, 3 * M + 2:3 * M + 3]
        beta  = p[:, 3 * M + 3:3 * M + 4]      # softplus already applied
        g     = p[:, 3 * M + 4:3 * M + 5]      # sigmoid already applied
        gamma = p[:, 3 * M + 5:3 * M + 6]      # 1 + softplus already applied

        # ---- content addressing: cosine similarity, VPU mul + sublane reduce ----
        k_eps = k + 1e-16                                   # (B, M)
        mem_eps = mem + 1e-16                               # (B, M, N)
        dots = jnp.sum(k_eps[:, :, None] * mem_eps, axis=1)           # (B, N)
        m_norm = jnp.sqrt(jnp.sum(mem_eps * mem_eps, axis=1))         # (B, N)
        k_norm = jnp.sqrt(jnp.sum(k_eps * k_eps, axis=1, keepdims=True))  # (B, 1)
        cos = dots / jnp.maximum(k_norm * m_norm, 1e-8)     # exact divide
        wc = jax.nn.softmax(beta * cos, axis=-1)            # (B, N)

        # ---- interpolation with previous weights ----
        wg = g * wc + (1.0 - g) * w_prev                    # (B, N)

        # ---- circular convolution with 3-tap shift kernel [s_-1, s_0, s_+1] ----
        w_m1 = pltpu.roll(wg, shift=1, axis=1)              # wg[(i-1) mod N]
        w_p1 = pltpu.roll(wg, shift=N - 1, axis=1)          # wg[(i+1) mod N]
        w_hat = s0 * w_m1 + s1 * wg + s2 * w_p1

        # ---- sharpening (clamp before pow; exact normalization — w recurs) ----
        w_pow = jnp.power(jnp.maximum(w_hat, 1e-16), gamma)
        w = w_pow / (jnp.sum(w_pow, axis=-1, keepdims=True) + 1e-16)

        w_state[...] = w
        w_out_ref[tt_i] = w

        # ---- fused memory write: mem' = mem + (a - mem*e) * w ----
        mem_out_ref[...] = mem + (a[:, :, None] - mem * e[:, :, None]) * w[:, None, :]
        return carry

    lax.fori_loop(0, TT, step, 0, unroll=True)


@functools.partial(jax.jit, static_argnames=("tt",))
def ntm_write_head_rollout(hid_seq, w_pre, mem_T, fc_w, fc_b, *, tt=None):
    """Fused T-step rollout of the write head (one pallas_call).

    hid_seq : (T, B, C)        controller hidden states per step
    w_pre   : (B, N)           initial write weights
    mem_T   : (M, N) or (B, M, N)  memory with N on lanes (PyTorch memory is
                               (N, M); transpose once outside and keep it)
    fc_w    : (3M+6, C)        nn.Linear weight
    fc_b    : (3M+6,)          nn.Linear bias
    returns : w_seq (T, B, N), new_mem (B, M, N)
    """
    T, B, C = hid_seq.shape
    if mem_T.ndim == 2:
        M, N = mem_T.shape
        mem0 = jnp.broadcast_to(mem_T.astype(jnp.float32)[None], (B, M, N))
    else:
        Bm, M, N = mem_T.shape
        assert Bm == B
        mem0 = mem_T.astype(jnp.float32)
    out_dim = 3 * M + 6
    assert fc_w.shape == (out_dim, C) and fc_b.shape == (out_dim,)
    assert w_pre.shape == (B, N)

    if tt is None:                      # timesteps per grid iteration
        tt = 1
        for cand in (32, 16, 8, 4, 2, 1):
            if T % cand == 0:
                tt = cand
                break
    assert T % tt == 0

    # ---- HOISTED fc_write + recurrence-independent activations (XLA side) ----
    o = (jnp.dot(hid_seq.astype(jnp.float32).reshape(T * B, C),
                 fc_w.astype(jnp.float32).T,
                 preferred_element_type=jnp.float32)
         + fc_b.astype(jnp.float32))                       # (T*B, 3M+6)
    k     = o[:, 0:M]
    beta  = jax.nn.softplus(o[:, M:M + 1])
    g     = jax.nn.sigmoid(o[:, M + 1:M + 2])
    s     = jax.nn.softmax(o[:, M + 2:M + 5], axis=-1)
    gamma = 1.0 + jax.nn.softplus(o[:, M + 5:M + 6])
    e     = jax.nn.sigmoid(o[:, M + 6:2 * M + 6])
    a     = o[:, 2 * M + 6:3 * M + 6]
    # 32-aligned packed layout: [k | e | a | s(3) | beta | g | gamma | pad]
    packed = jnp.concatenate([k, e, a, s, beta, g, gamma], axis=-1)   # (T*B, 3M+6)
    P = max(128, pl.cdiv(out_dim, 128) * 128)
    params = jnp.pad(packed, ((0, 0), (0, P - out_dim))).reshape(T, B, P)

    kernel = functools.partial(ntm_write_head_kernel, M=M, N=N, TT=tt)
    grid_spec = pltpu.PrefetchScalarGridSpec(
        num_scalar_prefetch=0,
        grid=(T // tt,),
        in_specs=[
            pl.BlockSpec((tt, B, P), lambda c: (c, 0, 0)),     # packed params/chunk
            pl.BlockSpec((B, N), lambda c: (0, 0)),            # w_pre (c==0 only)
            pl.BlockSpec((B, M, N), lambda c: (0, 0, 0)),      # initial memory
        ],
        out_specs=(
            pl.BlockSpec((tt, B, N), lambda c: (c, 0, 0)),     # w per step
            pl.BlockSpec((B, M, N), lambda c: (0, 0, 0)),      # memory (resident)
        ),
        scratch_shapes=[pltpu.VMEM((B, N), jnp.float32)],      # recurrent w state
    )
    w_seq, new_mem = pl.pallas_call(
        kernel,
        grid_spec=grid_spec,
        out_shape=(jax.ShapeDtypeStruct((T, B, N), jnp.float32),
                   jax.ShapeDtypeStruct((B, M, N), jnp.float32)),
        compiler_params=pltpu.CompilerParams(
            dimension_semantics=("arbitrary",)),               # true recurrence
    )(params, w_pre.astype(jnp.float32), mem0)
    return w_seq, new_mem


def ntm_write_head(hid, w_pre, mem_T, fc_w, fc_b):
    """Single forward() of NTMWriteHead == the T == 1 case of the rollout."""
    w_seq, new_mem = ntm_write_head_rollout(hid[None], w_pre, mem_T, fc_w, fc_b, tt=1)
    return w_seq[0], new_mem


def ntm_write_ref(hid_seq, w_pre, mem0_bmn, fc_w, fc_b):
    """Pure-JAX reference (same math, XLA ops) for correctness checking."""
    T = hid_seq.shape[0]
    _, M, _ = mem0_bmn.shape
    w, mem, ws = w_pre, mem0_bmn, []
    for t in range(T):
        o = hid_seq[t] @ fc_w.T + fc_b
        k = o[:, 0:M]
        beta = jax.nn.softplus(o[:, M:M + 1])
        g = jax.nn.sigmoid(o[:, M + 1:M + 2])
        s = jax.nn.softmax(o[:, M + 2:M + 5], axis=-1)
        gamma = 1.0 + jax.nn.softplus(o[:, M + 5:M + 6])
        e = jax.nn.sigmoid(o[:, M + 6:2 * M + 6])
        a = o[:, 2 * M + 6:3 * M + 6]
        k_eps, mem_eps = k + 1e-16, mem + 1e-16
        dots = jnp.einsum("bm,bmn->bn", k_eps, mem_eps)
        k_norm = jnp.sqrt(jnp.sum(k_eps * k_eps, axis=1, keepdims=True))
        m_norm = jnp.sqrt(jnp.sum(mem_eps * mem_eps, axis=1))
        cos = dots / jnp.maximum(k_norm * m_norm, 1e-8)
        wc = jax.nn.softmax(beta * cos, axis=-1)
        wg = g * wc + (1.0 - g) * w
        w_hat = (s[:, 0:1] * jnp.roll(wg, 1, axis=1) + s[:, 1:2] * wg
                 + s[:, 2:3] * jnp.roll(wg, -1, axis=1))
        w_pow = jnp.power(jnp.maximum(w_hat, 1e-16), gamma)
        w = w_pow / (jnp.sum(w_pow, axis=-1, keepdims=True) + 1e-16)
        mem = mem + (a[:, :, None] - mem * e[:, :, None]) * w[:, None, :]
        ws.append(w)
    return jnp.stack(ws), mem


if __name__ == "__main__":
    B, C = 2, 32          # batch, controller hidden dim (cdim)
    N, M = 128, 32        # memory rows, memory width
    T = 8                 # rollout length for the fused demo
    out_dim = 3 * M + 6   # sum(write_lens) = M+1+1+3+1+M+M

    key = jax.random.PRNGKey(0)
    k_hid, k_seq, k_wpre, k_mem, k_w = jax.random.split(key, 5)

    hid = jax.random.normal(k_hid, (B, C), dtype=jnp.float32)
    hid_seq = jax.random.normal(k_seq, (T, B, C), dtype=jnp.float32)
    w_pre = jax.nn.softmax(jax.random.normal(k_wpre, (B, N), dtype=jnp.float32),
                           axis=-1)
    memory = 0.1 * jax.random.normal(k_mem, (N, M), dtype=jnp.float32)  # PyTorch (N,M)

    # nn.Linear(cdim, 3M+6)-shaped parameters
    fc_w = (1.0 / jnp.sqrt(C)) * jax.random.normal(k_w, (out_dim, C), jnp.float32)
    fc_b = jnp.zeros((out_dim,), dtype=jnp.float32)

    mem_T = memory.T                      # (M, N): N on lanes; keep this layout
    mem0_bmn = jnp.broadcast_to(mem_T[None], (B, M, N))

    # ---- module forward (single step) ----
    w, new_mem = ntm_write_head(hid, w_pre, mem_T, fc_w, fc_b)
    jax.block_until_ready((w, new_mem))
    assert w.shape == (B, N) and new_mem.shape == (B, M, N)
    w_ref1, mem_ref1 = ntm_write_ref(hid[None], w_pre, mem0_bmn, fc_w, fc_b)
    assert bool(jnp.allclose(w, w_ref1[0], atol=2e-3, rtol=2e-3))
    assert bool(jnp.allclose(new_mem, mem_ref1, atol=2e-3, rtol=2e-3))
    assert bool(jnp.all(jnp.abs(jnp.sum(w, axis=-1) - 1.0) < 1e-3))

    # ---- fused multi-step rollout: chunked (TT=4 -> 2 grid steps), one launch ----
    w_seq, final_mem = ntm_write_head_rollout(hid_seq, w_pre, mem_T, fc_w, fc_b, tt=4)
    jax.block_until_ready((w_seq, final_mem))
    assert w_seq.shape == (T, B, N) and final_mem.shape == (B, M, N)
    w_seq_ref, mem_ref = ntm_write_ref(hid_seq, w_pre, mem0_bmn, fc_w, fc_b)
    assert bool(jnp.allclose(w_seq, w_seq_ref, atol=2e-3, rtol=2e-3))
    assert bool(jnp.allclose(final_mem, mem_ref, atol=2e-3, rtol=2e-3))

    print("KERNEL_OK")
</pallas_src>

<mosaic_0001>
module attributes {stable_mosaic.version = 11 : i64} {
  func.func @ntm_write_head_kernel(%arg0: i32, %arg1: memref<1x2x128xf32, #tpu.memory_space<vmem>>, %arg2: memref<2x128xf32, #tpu.memory_space<vmem>>, %arg3: memref<2x32x128xf32, #tpu.memory_space<vmem>>, %arg4: memref<1x2x128xf32, #tpu.memory_space<vmem>>, %arg5: memref<2x32x128xf32, #tpu.memory_space<vmem>>, %arg6: memref<2x128xf32, #tpu.memory_space<vmem>>) attributes {dimension_semantics = [#tpu.dimension_semantics<arbitrary>], iteration_bounds = array<i64: 1>, scalar_prefetch = 0 : i64, scratch_operands = 1 : i64, tpu.core_type = #tpu.core_type<tc>, window_params = [{transform_indices = @transform_0, window_bounds = array<i64: 1, 2, 128>}, {pipeline_mode = #tpu.pipeline_mode<synchronous>, transform_indices = @transform_1, window_bounds = array<i64: 2, 128>}, {pipeline_mode = #tpu.pipeline_mode<synchronous>, transform_indices = @transform_2, window_bounds = array<i64: 2, 32, 128>}, {transform_indices = @transform_3, window_bounds = array<i64: 1, 2, 128>}, {pipeline_mode = #tpu.pipeline_mode<synchronous>, transform_indices = @transform_4, window_bounds = array<i64: 2, 32, 128>}]} {
    %c0_i32 = arith.constant 0 : i32
    %0 = arith.cmpi eq, %arg0, %c0_i32 : i32
    %1 = arith.extui %0 : i1 to i32
    %c0_i32_0 = arith.constant 0 : i32
    %2 = arith.cmpi ne, %1, %c0_i32_0 : i32
    scf.if %2 {
      %c0_28 = arith.constant 0 : index
      %c0_29 = arith.constant 0 : index
      %c0_30 = arith.constant 0 : index
      %93 = vector.load %arg3[%c0_28, %c0_29, %c0_30] : memref<2x32x128xf32, #tpu.memory_space<vmem>>, vector<2x32x128xf32>
      %c0_31 = arith.constant 0 : index
      %c0_32 = arith.constant 0 : index
      %c0_33 = arith.constant 0 : index
      %94 = vector.load %arg5[%c0_31, %c0_32, %c0_33] : memref<2x32x128xf32, #tpu.memory_space<vmem>>, vector<2x32x128xf32>
      tpu.vector_store %arg5[%c0_31, %c0_32, %c0_33], %93 {strides = array<i32>} : memref<2x32x128xf32, #tpu.memory_space<vmem>>, vector<2x32x128xf32>,
      %c0_34 = arith.constant 0 : index
      %c0_35 = arith.constant 0 : index
      %95 = vector.load %arg2[%c0_34, %c0_35] : memref<2x128xf32, #tpu.memory_space<vmem>>, vector<2x128xf32>
      %c0_36 = arith.constant 0 : index
      %c0_37 = arith.constant 0 : index
      %96 = vector.load %arg6[%c0_36, %c0_37] : memref<2x128xf32, #tpu.memory_space<vmem>>, vector<2x128xf32>
      tpu.vector_store %arg6[%c0_36, %c0_37], %95 {strides = array<i32>} : memref<2x128xf32, #tpu.memory_space<vmem>>, vector<2x128xf32>,
    } else {
    }
    %c0_i32_1 = arith.constant 0 : i32
    %3 = arith.index_cast %c0_i32_1 : i32 to index
    %c0 = arith.constant 0 : index
    %c0_2 = arith.constant 0 : index
    %4 = vector.load %arg1[%3, %c0, %c0_2] : memref<1x2x128xf32, #tpu.memory_space<vmem>>, vector<1x2x128xf32>
    %5 = vector.shape_cast %4 : vector<1x2x128xf32> to vector<2x128xf32>
    %c0_3 = arith.constant 0 : index
    %c0_4 = arith.constant 0 : index
    %c0_5 = arith.constant 0 : index
    %6 = vector.load %arg5[%c0_3, %c0_4, %c0_5] : memref<2x32x128xf32, #tpu.memory_space<vmem>>, vector<2x32x128xf32>
    %c0_6 = arith.constant 0 : index
    %c0_7 = arith.constant 0 : index
    %7 = vector.load %arg6[%c0_6, %c0_7] : memref<2x128xf32, #tpu.memory_space<vmem>>, vector<2x128xf32>
    %8 = vector.extract_strided_slice %5 {offsets = [0, 0], sizes = [2, 32], strides = [1, 1]} : vector<2x128xf32> to vector<2x32xf32>
    %9 = vector.extract_strided_slice %5 {offsets = [0, 32], sizes = [2, 32], strides = [1, 1]} : vector<2x128xf32> to vector<2x32xf32>
    %10 = vector.extract_strided_slice %5 {offsets = [0, 64], sizes = [2, 32], strides = [1, 1]} : vector<2x128xf32> to vector<2x32xf32>
    %11 = vector.extract_strided_slice %5 {offsets = [0, 96], sizes = [2, 1], strides = [1, 1]} : vector<2x128xf32> to vector<2x1xf32>
    %12 = vector.extract_strided_slice %5 {offsets = [0, 97], sizes = [2, 1], strides = [1, 1]} : vector<2x128xf32> to vector<2x1xf32>
    %13 = vector.extract_strided_slice %5 {offsets = [0, 98], sizes = [2, 1], strides = [1, 1]} : vector<2x128xf32> to vector<2x1xf32>
    %14 = vector.extract_strided_slice %5 {offsets = [0, 99], sizes = [2, 1], strides = [1, 1]} : vector<2x128xf32> to vector<2x1xf32>
    %15 = vector.extract_strided_slice %5 {offsets = [0, 100], sizes = [2, 1], strides = [1, 1]} : vector<2x128xf32> to vector<2x1xf32>
    %16 = vector.extract_strided_slice %5 {offsets = [0, 101], sizes = [2, 1], strides = [1, 1]} : vector<2x128xf32> to vector<2x1xf32>
    %cst = arith.constant 1.000000e-16 : f32
    %17 = vector.broadcast %cst : f32 to vector<2x32xf32>
    %18 = arith.addf %8, %17 : vector<2x32xf32>
    %cst_8 = arith.constant 1.000000e-16 : f32
    %19 = vector.broadcast %cst_8 : f32 to vector<2x32x128xf32>
    %20 = arith.addf %6, %19 : vector<2x32x128xf32>
    %21 = vector.shape_cast %18 : vector<2x32xf32> to vector<2x32x1xf32>
    %22 = vector.broadcast %21 : vector<2x32x1xf32> to vector<2x32x128xf32>
    %23 = arith.mulf %22, %20 : vector<2x32x128xf32>
    %cst_9 = arith.constant dense<0.000000e+00> : vector<2x128xf32>
    %24 = vector.multi_reduction <add>, %23, %cst_9 [1] : vector<2x32x128xf32> to vector<2x128xf32>
    %25 = arith.mulf %20, %20 : vector<2x32x128xf32>
    %cst_10 = arith.constant dense<0.000000e+00> : vector<2x128xf32>
    %26 = vector.multi_reduction <add>, %25, %cst_10 [1] : vector<2x32x128xf32> to vector<2x128xf32>
    %27 = math.sqrt %26 : vector<2x128xf32>
    %28 = arith.mulf %18, %18 : vector<2x32xf32>
    %cst_11 = arith.constant dense<0.000000e+00> : vector<2xf32>
    %29 = vector.multi_reduction <add>, %28, %cst_11 [1] : vector<2x32xf32> to vector<2xf32>
    %30 = vector.shape_cast %29 : vector<2xf32> to vector<2x1xf32>
    %31 = math.sqrt %30 : vector<2x1xf32>
    %32 = vector.broadcast %31 : vector<2x1xf32> to vector<2x128xf32>
    %33 = arith.mulf %32, %27 : vector<2x128xf32>
    %cst_12 = arith.constant 9.99999993E-9 : f32
    %34 = vector.broadcast %cst_12 : f32 to vector<2x128xf32>
    %35 = arith.maximumf %33, %34 : vector<2x128xf32>
    %36 = arith.divf %24, %35 : vector<2x128xf32>
    %37 = vector.broadcast %14 : vector<2x1xf32> to vector<2x128xf32>
    %38 = arith.mulf %37, %36 : vector<2x128xf32>
    %cst_13 = arith.constant dense<0xFF800000> : vector<2xf32>
    %39 = vector.multi_reduction <maximumf>, %38, %cst_13 [1] : vector<2x128xf32> to vector<2xf32>
    %cst_14 = arith.constant 0xFF800000 : f32
    %40 = vector.broadcast %cst_14 : f32 to vector<2xf32>
    %41 = arith.maximumf %40, %39 : vector<2xf32>
    %42 = vector.shape_cast %41 : vector<2xf32> to vector<2x1xf32>
    %43 = vector.broadcast %42 : vector<2x1xf32> to vector<2x128xf32>
    %44 = arith.subf %38, %43 : vector<2x128xf32>
    %45 = math.exp %44 : vector<2x128xf32>
    %cst_15 = arith.constant dense<0.000000e+00> : vector<2xf32>
    %46 = vector.multi_reduction <add>, %45, %cst_15 [1] : vector<2x128xf32> to vector<2xf32>
    %47 = vector.shape_cast %46 : vector<2xf32> to vector<2x1xf32>
    %48 = vector.broadcast %47 : vector<2x1xf32> to vector<2x128xf32>
    %49 = arith.divf %45, %48 : vector<2x128xf32>
    %50 = vector.broadcast %15 : vector<2x1xf32> to vector<2x128xf32>
    %51 = arith.mulf %50, %49 : vector<2x128xf32>
    %cst_16 = arith.constant 1.000000e+00 : f32
    %52 = vector.broadcast %cst_16 : f32 to vector<2x1xf32>
    %53 = arith.subf %52, %15 : vector<2x1xf32>
    %54 = vector.broadcast %53 : vector<2x1xf32> to vector<2x128xf32>
    %55 = arith.mulf %54, %7 : vector<2x128xf32>
    %56 = arith.addf %51, %55 : vector<2x128xf32>
    %c1_i32 = arith.constant 1 : i32
    %57 = tpu.dynamic_rotate %56 by %c1_i32 dim 1 : vector<2x128xf32>, i32 -> vector<2x128xf32>
    %c127_i32 = arith.constant 127 : i32
    %58 = tpu.dynamic_rotate %56 by %c127_i32 dim 1 : vector<2x128xf32>, i32 -> vector<2x128xf32>
    %59 = vector.broadcast %11 : vector<2x1xf32> to vector<2x128xf32>
    %60 = arith.mulf %59, %57 : vector<2x128xf32>
    %61 = vector.broadcast %12 : vector<2x1xf32> to vector<2x128xf32>
    %62 = arith.mulf %61, %56 : vector<2x128xf32>
    %63 = arith.addf %60, %62 : vector<2x128xf32>
    %64 = vector.broadcast %13 : vector<2x1xf32> to vector<2x128xf32>
    %65 = arith.mulf %64, %58 : vector<2x128xf32>
    %66 = arith.addf %63, %65 : vector<2x128xf32>
    %cst_17 = arith.constant 1.000000e-16 : f32
    %67 = vector.broadcast %cst_17 : f32 to vector<2x128xf32>
    %68 = arith.maximumf %66, %67 : vector<2x128xf32>
    %69 = vector.broadcast %16 : vector<2x1xf32> to vector<2x128xf32>
    %70 = math.powf %68, %69 : vector<2x128xf32>
    %cst_18 = arith.constant dense<0.000000e+00> : vector<2xf32>
    %71 = vector.multi_reduction <add>, %70, %cst_18 [1] : vector<2x128xf32> to vector<2xf32>
    %72 = vector.shape_cast %71 : vector<2xf32> to vector<2x1xf32>
    %cst_19 = arith.constant 1.000000e-16 : f32
    %73 = vector.broadcast %cst_19 : f32 to vector<2x1xf32>
    %74 = arith.addf %72, %73 : vector<2x1xf32>
    %75 = vector.broadcast %74 : vector<2x1xf32> to vector<2x128xf32>
    %76 = arith.divf %70, %75 : vector<2x128xf32>
    %c0_20 = arith.constant 0 : index
    %c0_21 = arith.constant 0 : index
    %77 = vector.load %arg6[%c0_20, %c0_21] : memref<2x128xf32, #tpu.memory_space<vmem>>, vector<2x128xf32>
    tpu.vector_store %arg6[%c0_20, %c0_21], %76 {strides = array<i32>} : memref<2x128xf32, #tpu.memory_space<vmem>>, vector<2x128xf32>,
    %78 = arith.index_cast %c0_i32_1 : i32 to index
    %c0_22 = arith.constant 0 : index
    %c0_23 = arith.constant 0 : index
    %79 = vector.load %arg4[%78, %c0_22, %c0_23] : memref<1x2x128xf32, #tpu.memory_space<vmem>>, vector<1x2x128xf32>
    %80 = vector.shape_cast %79 : vector<1x2x128xf32> to vector<2x128xf32>
    %81 = vector.shape_cast %76 : vector<2x128xf32> to vector<1x2x128xf32>
    tpu.vector_store %arg4[%78, %c0_22, %c0_23], %81 {strides = array<i32>} : memref<1x2x128xf32, #tpu.memory_space<vmem>>, vector<1x2x128xf32>,
    %82 = vector.shape_cast %10 : vector<2x32xf32> to vector<2x32x1xf32>
    %83 = vector.shape_cast %9 : vector<2x32xf32> to vector<2x32x1xf32>
    %84 = vector.broadcast %83 : vector<2x32x1xf32> to vector<2x32x128xf32>
    %85 = arith.mulf %6, %84 : vector<2x32x128xf32>
    %86 = vector.broadcast %82 : vector<2x32x1xf32> to vector<2x32x128xf32>
    %87 = arith.subf %86, %85 : vector<2x32x128xf32>
    %88 = vector.shape_cast %76 : vector<2x128xf32> to vector<2x1x128xf32>
    %89 = vector.broadcast %88 : vector<2x1x128xf32> to vector<2x32x128xf32>
    %90 = arith.mulf %87, %89 : vector<2x32x128xf32>
    %91 = arith.addf %6, %90 : vector<2x32x128xf32>
    %c0_24 = arith.constant 0 : index
    %c0_25 = arith.constant 0 : index
    %c0_26 = arith.constant 0 : index
    %92 = vector.load %arg5[%c0_24, %c0_25, %c0_26] : memref<2x32x128xf32, #tpu.memory_space<vmem>>, vector<2x32x128xf32>
    tpu.vector_store %arg5[%c0_24, %c0_25, %c0_26], %91 {strides = array<i32>} : memref<2x32x128xf32, #tpu.memory_space<vmem>>, vector<2x32x128xf32>,
    %c1_i32_27 = arith.constant 1 : i32
    return
  }
  func.func @transform_0(%arg0: i32) -> (i32, i32, i32) {
    %c0_i32 = arith.constant 0 : i32
    %c0_i32_0 = arith.constant 0 : i32
    %c0_i32_1 = arith.constant 0 : i32
    return %arg0, %c0_i32, %c0_i32_0 : i32, i32, i32
  }
  func.func @transform_1(%arg0: i32) -> (i32, i32) {
    %c0_i32 = arith.constant 0 : i32
    %c0_i32_0 = arith.constant 0 : i32
    %c0_i32_1 = arith.constant 0 : i32
    return %c0_i32, %c0_i32_0 : i32, i32
  }
  func.func @transform_2(%arg0: i32) -> (i32, i32, i32) {
    %c0_i32 = arith.constant 0 : i32
    %c0_i32_0 = arith.constant 0 : i32
    %c0_i32_1 = arith.constant 0 : i32
    %c0_i32_2 = arith.constant 0 : i32
    return %c0_i32, %c0_i32_0, %c0_i32_1 : i32, i32, i32
  }
  func.func @transform_3(%arg0: i32) -> (i32, i32, i32) {
    %c0_i32 = arith.constant 0 : i32
    %c0_i32_0 = arith.constant 0 : i32
    %c0_i32_1 = arith.constant 0 : i32
    return %arg0, %c0_i32, %c0_i32_0 : i32, i32, i32
  }
  func.func @transform_4(%arg0: i32) -> (i32, i32, i32) {
    %c0_i32 = arith.constant 0 : i32
    %c0_i32_0 = arith.constant 0 : i32
    %c0_i32_1 = arith.constant 0 : i32
    %c0_i32_2 = arith.constant 0 : i32
    return %c0_i32, %c0_i32_0, %c0_i32_1 : i32, i32, i32
  }
}

</mosaic_0001>

<llo_original>
// kernel: ntm_write_head_rollout.1
$region0: #{ntm_write_head_rollout.1}
  #allocation0 [shape = 'u32[]', space=smem, size = 0x4, offset = 0x4, fixed_abs, tag = 'smem constant byte address 0x4 - core index']
  #allocation1 [shape = 'u32[144,128]{1,0:T(1,128)}', space=vmem, size = 0x12000, scoped, tag = 'internal scratch']
  #allocation2 [shape = 'f32[2,128]{1,0:T(2,128)}', space=vmem, size = 0x400, scoped, tag = 'scratch operand']
  %s0 = inlined_call_operand.vmem [shape: f32[1,2,128], index: 0, kind: input, shape index: {}]
  %s1 = inlined_call_operand.vmem [shape: f32[2,128], index: 1, kind: input, shape index: {}]
  %s2 = inlined_call_operand.vmem [shape: f32[2,32,128], index: 2, kind: input, shape index: {}]
  %s3 = inlined_call_operand.hbm [shape: f32[1,2,128], index: 3, kind: output, shape index: {0}]
  %s4 = inlined_call_operand.hbm [shape: f32[2,32,128], index: 4, kind: output, shape index: {1}]
  %5 = xla_tuple %s3, %s4
  %s6 = sld [smem:[#allocation0]]
  $region34: #{ntm_write_head_rollout.1} parent=0
    _
  %s8 = ssub.s32 1, %s6
  %s9 = scalar_select 0, %s8, %s6
  $region1: #{ntm_write_head_rollout.1} parent=0
    #allocation3 [shape = 'u8[1024]{0}', space=vmem, size = 0x400, scoped, tag = 'output window, operand 0, single buffered']
    #allocation4 [shape = 's32[1]{0}', space=sflag, size = 0x4, scoped, tag = 'scoped memory for ntm_write_head_rollout.1']
    #allocation5 [shape = 'u8[32768]{0}', space=vmem, size = 0x8000, scoped, tag = 'output window, operand 1, single buffered']
    #allocation6 [shape = 's32[1]{0}', space=sflag, size = 0x4, scoped, tag = 'scoped memory for ntm_write_head_rollout.1']
    %10 = vsyncpa [#allocation4], 0
    %11 = vsyncpa [#allocation6], 0
    // Predicated region
    $region2: #{ntm_write_head_rollout.1} parent=1 // pred_check
      _
    $region3: #{ntm_write_head_rollout.1} parent=1 // pred_check_branch
      %13 = sbr.rel (0) target = $region5
    $region4: #{ntm_write_head_rollout.1} parent=1 // pred_region
      _
    $region5: #{ntm_write_head_rollout.1} parent=1 // pred_fallthru
      _
    // Predicated region
    $region6: #{ntm_write_head_rollout.1} parent=1 // pred_check
      _
    $region7: #{ntm_write_head_rollout.1} parent=1 // pred_check_branch
      %15 = sbr.rel (0) target = $region9
    $region8: #{ntm_write_head_rollout.1} parent=1 // pred_region
      _
    $region9: #{ntm_write_head_rollout.1} parent=1 // pred_fallthru
      _
    // Predicated region
    $region10: #{ntm_write_head_rollout.1} parent=1 // pred_check
      _
    $region11: #{ntm_write_head_rollout.1} parent=1 // pred_check_branch
      %17 = sbr.rel (0) target = $region13
    $region12: #{ntm_write_head_rollout.1} parent=1 // pred_region
      _
    $region13: #{ntm_write_head_rollout.1} parent=1 // pred_fallthru
      _
    %p18 = scmp.eq.s32.totalorder 0, 0
    // Predicated region
    $region14: #{ntm_write_head_rollout.1} parent=1 // pred_check
      %p19 = pneg %p18
    $region15: #{ntm_write_head_rollout.1} parent=1 // pred_check_branch
      %21 = sbr.rel (%p19) target = $region17
    $region16: #{ntm_write_head_rollout.1} parent=1 // pred_region
      %v22 = vld [vmem:[%s2] sm:$0xff]
      %v23 = vld [vmem:[%s2 + $0x8] sm:$0xff]
      %v24 = vld [vmem:[%s2 + $0x10] sm:$0xff]
      %v25 = vld [vmem:[%s2 + $0x18] sm:$0xff]
      %v26 = vld [vmem:[%s2 + $0x20] sm:$0xff]
      %v27 = vld [vmem:[%s2 + $0x28] sm:$0xff]
      %v28 = vld [vmem:[%s2 + $0x30] sm:$0xff]
      %v29 = vld [vmem:[%s2 + $0x38] sm:$0xff]
      %30 = vst [vmem:[#allocation5] sm:$0xff] %v22
      %31 = vst [vmem:[#allocation5 + $0x8] sm:$0xff] %v23
      %32 = vst [vmem:[#allocation5 + $0x10] sm:$0xff] %v24
      %33 = vst [vmem:[#allocation5 + $0x18] sm:$0xff] %v25
      %34 = vst [vmem:[#allocation5 + $0x20] sm:$0xff] %v26
      %35 = vst [vmem:[#allocation5 + $0x28] sm:$0xff] %v27
      %36 = vst [vmem:[#allocation5 + $0x30] sm:$0xff] %v28
      %37 = vst [vmem:[#allocation5 + $0x38] sm:$0xff] %v29
      %v38 = vld [vmem:[%s1] sm:$0x3]
      %39 = vst [vmem:[#allocation2] sm:$0x3] %v38
    $region17: #{ntm_write_head_rollout.1} parent=1 // pred_fallthru
      _
    %v40 = vld [vmem:[%s0] sm:$0x3]
    %v41 = vld [vmem:[#allocation5] sm:$0xff]
    %v42 = vld [vmem:[#allocation5 + $0x8] sm:$0xff]
    %v43 = vld [vmem:[#allocation5 + $0x10] sm:$0xff]
    %v44 = vld [vmem:[#allocation5 + $0x18] sm:$0xff]
    %v45 = vld [vmem:[#allocation5 + $0x20] sm:$0xff]
    %v46 = vld [vmem:[#allocation5 + $0x28] sm:$0xff]
    %v47 = vld [vmem:[#allocation5 + $0x30] sm:$0xff]
    %v48 = vld [vmem:[#allocation5 + $0x38] sm:$0xff]
    %v49 = vld [vmem:[#allocation2] sm:$0x3]
    %v50 = vadd.f32 %v40, 1e-16
    %v51 = vadd.f32 %v41, 1e-16
    %v52 = vadd.f32 %v42, 1e-16
    %v53 = vadd.f32 %v43, 1e-16
    %v54 = vadd.f32 %v44, 1e-16
    %v55 = vadd.f32 %v45, 1e-16
    %v56 = vadd.f32 %v46, 1e-16
    %v57 = vadd.f32 %v47, 1e-16
    %v58 = vadd.f32 %v48, 1e-16
    %v59 = vlaneseq
    %v60 = vshrl.u32 %v59, 7
    %v61 = vsub.s32 0, %v60
    %v62 = vrot.slane %v50, %v61
    %64 = vbcast.lane.b32.xlu0 %v62, 256
    %v65 = vpop.permute.xlu0 %64
    %s67 = sor.u32 256, 8
    %68 = vbcast.lane.b32.xlu0 %v62, %s67
    %v69 = vpop.permute.xlu0 %68
    %s71 = sor.u32 256, 16
    %72 = vbcast.lane.b32.xlu0 %v62, %s71
    %v73 = vpop.permute.xlu0 %72
    %s75 = sor.u32 256, 24
    %76 = vbcast.lane.b32.xlu0 %v62, %s75
    %v77 = vpop.permute.xlu0 %76
    %v78 = vlaneseq
    %v79 = vshrl.u32 %v78, 7
    %v80 = vsub.s32 1, %v79
    %v81 = vrot.slane %v50, %v80
    %83 = vbcast.lane.b32.xlu0 %v81, 256
    %v84 = vpop.permute.xlu0 %83
    %s86 = sor.u32 256, 8
    %87 = vbcast.lane.b32.xlu0 %v81, %s86
    %v88 = vpop.permute.xlu0 %87
    %s90 = sor.u32 256, 16
    %91 = vbcast.lane.b32.xlu0 %v81, %s90
    %v92 = vpop.permute.xlu0 %91
    %s94 = sor.u32 256, 24
    %95 = vbcast.lane.b32.xlu0 %v81, %s94
    %v96 = vpop.permute.xlu0 %95
    %v97 = vmul.f32 %v65, %v51
    %v98 = vmul.f32 %v69, %v52
    %v99 = vmul.f32 %v73, %v53
    %v100 = vmul.f32 %v77, %v54
    %v101 = vmul.f32 %v84, %v55
    %v102 = vmul.f32 %v88, %v56
    %v103 = vmul.f32 %v92, %v57
    %v104 = vmul.f32 %v96, %v58
    %v105 = vadd.f32 %v97, %v98
    %v106 = vadd.f32 %v105, %v99
    %v107 = vadd.f32 %v106, %v100
    %v108 = vrot.slane %v107, 4
    %v109 = vadd.f32 %v107, %v108
    %v110 = vrot.slane %v109, 2
    %v111 = vadd.f32 %v109, %v110
    %v112 = vrot.slane %v111, 1
    %v113 = vadd.f32 %v111, %v112
    %v114 = vadd.f32 %v101, %v102
    %v115 = vadd.f32 %v114, %v103
    %v116 = vadd.f32 %v115, %v104
    %v117 = vrot.slane %v116, 4
    %v118 = vadd.f32 %v116, %v117
    %v119 = vrot.slane %v118, 2
    %v120 = vadd.f32 %v118, %v119
    %v121 = vrot.slane %v120, 1
    %v122 = vadd.f32 %v120, %v121
    %v123 = vmul.f32 %v51, %v51
    %v124 = vmul.f32 %v52, %v52
    %v125 = vmul.f32 %v53, %v53
    %v126 = vmul.f32 %v54, %v54
    %v127 = vmul.f32 %v55, %v55
    %v128 = vmul.f32 %v56, %v56
    %v129 = vmul.f32 %v57, %v57
    %v130 = vmul.f32 %v58, %v58
    %v131 = vadd.f32 %v123, %v124
    %v132 = vadd.f32 %v131, %v125
    %v133 = vadd.f32 %v132, %v126
    %v134 = vrot.slane %v133, 4
    %v135 = vadd.f32 %v133, %v134
    %v136 = vrot.slane %v135, 2
    %v137 = vadd.f32 %v135, %v136
    %v138 = vrot.slane %v137, 1
    %v139 = vadd.f32 %v137, %v138
    %v140 = vadd.f32 %v127, %v128
    %v141 = vadd.f32 %v140, %v129
    %v142 = vadd.f32 %v141, %v130
    %v143 = vrot.slane %v142, 4
    %v144 = vadd.f32 %v142, %v143
    %v145 = vrot.slane %v144, 2
    %v146 = vadd.f32 %v144, %v145
    %v147 = vrot.slane %v146, 1
    %v148 = vadd.f32 %v146, %v147
    %v149 = vrsqrt.pop %v139
    %v150 = vmul.f32 %v139, %v149
    %vm151 = vcmp.eq.f32.partialorder %v139, inf
    %v152 = vsel %vm151, %v139, %v150
    %vm153 = vcmp.eq.f32.partialorder %v139, 0.0
    %v154 = vand.u32 %v139, 2147483648
    %v155 = vsel %vm153, %v154, %v152
    %v156 = vrsqrt.pop %v148
    %v157 = vmul.f32 %v148, %v156
    %vm158 = vcmp.eq.f32.partialorder %v148, inf
    %v159 = vsel %vm158, %v148, %v157
    %vm160 = vcmp.eq.f32.partialorder %v148, 0.0
    %v161 = vand.u32 %v148, 2147483648
    %v162 = vsel %vm160, %v161, %v159
    %v163 = vmul.f32 %v50, %v50
    %vm164 = vcmask 254976
    %v165 = vsel %vm164, %v163, 0.0
    %166 = vadd.xlane.f32.xlu0 %v165
    %v167 = vpop.xlane.xlu0 %166
    %v168 = vrsqrt.pop %v167
    %v169 = vmul.f32 %v167, %v168
    %vm170 = vcmp.eq.f32.partialorder %v167, inf
    %v171 = vsel %vm170, %v167, %v169
    %vm172 = vcmp.eq.f32.partialorder %v167, 0.0
    %v173 = vand.u32 %v167, 2147483648
    %v174 = vsel %vm172, %v173, %v171
    %vm177 = vcmask 1041409
    %v178 = vsel %vm177, %v162, %v155
    %v180 = vmul.f32 %v174, %v178
    %v181 = vmax.f32 %v180, 1e-08
    %v183 = vrot.slane %v181, 1
    %v186 = vrcp.pop %v181
    %v187 = vmul.f32 %v113, %v186
    %v188 = vrcp.pop %v183
    %v189 = vmul.f32 %v122, %v188
    %191 = vset.pattern.permute.xlu0 99
    %192 = vperm.xlu0 %191, %v40
    %v193 = vpop.permute.xlu0 %192
    %v197 = vrot.slane %v189, 7
    %v198 = vsel %vm177, %v197, %v187
    %v200 = vmul.f32 %v193, %v198
    %vm201 = vcmask 1041408
    %v202 = vsel %vm201, %v200, -inf
    %203 = vmax.xlane.f32.xlu0 %v202
    %v204 = vpop.xlane.xlu0 %203
    %v205 = vsub.f32 %v200, %v204
    %v206 = vmul.f32 %v205, 1.442695
    %v207 = vpow.pop %v206
    %v208 = vsel %vm201, %v207, 0.0
    %209 = vadd.xlane.f32.xlu0 %v208
    %v210 = vpop.xlane.xlu0 %209
    %v211 = vrcp.pop %v210
    %v212 = vmul.f32 %v207, %v211
    %213 = vset.pattern.permute.xlu0 100
    %214 = vperm.xlu0 %213, %v40
    %v215 = vpop.permute.xlu0 %214
    %v217 = vmul.f32 %v215, %v212
    %v218 = vsub.f32 1.0, %v40
    %220 = vset.pattern.permute.xlu0 100
    %221 = vperm.xlu0 %220, %v218
    %v222 = vpop.permute.xlu0 %221
    %v224 = vmul.f32 %v222, %v49
    %v225 = vadd.f32 %v217, %v224
    %226 = vrot.lane.b32.xlu0 %v225, 1
    %v227 = vpop.permute.xlu0 %226
    %228 = vrot.lane.b32.xlu0 %v225, 127
    %v229 = vpop.permute.xlu0 %228
    %230 = vset.pattern.permute.xlu0 96
    %231 = vperm.xlu0 %230, %v40
    %v232 = vpop.permute.xlu0 %231
    %v234 = vmul.f32 %v232, %v227
    %235 = vset.pattern.permute.xlu0 97
    %236 = vperm.xlu0 %235, %v40
    %v237 = vpop.permute.xlu0 %236
    %v239 = vmul.f32 %v237, %v225
    %v240 = vadd.f32 %v234, %v239
    %241 = vset.pattern.permute.xlu0 98
    %242 = vperm.xlu0 %241, %v40
    %v243 = vpop.permute.xlu0 %242
    %v245 = vmul.f32 %v243, %v229
    %v246 = vadd.f32 %v240, %v245
    %v247 = vmax.f32 %v246, 1e-16
    %248 = vset.pattern.permute.xlu0 101
    %249 = vperm.xlu0 %248, %v40
    %v250 = vpop.permute.xlu0 %249
    %v252 = vpow.f32 %v247, %v250
    %v253 = vsel %vm201, %v252, 0.0
    %254 = vadd.xlane.f32.xlu0 %v253
    %v255 = vpop.xlane.xlu0 %254
    %v256 = vadd.f32 %v255, 1e-16
    %v257 = vrcp.pop %v256
    %v258 = vmul.f32 %v252, %v257
    %259 = vst [vmem:[#allocation2] sm:$0x3] %v258
    %260 = vst [vmem:[#allocation3] sm:$0x3] %v258
    %v261 = vlaneseq
    %v262 = vshrl.u32 %v261, 7
    %v263 = vsub.s32 0, %v262
    %v264 = vrot.slane %v40, %v263
    %s266 = sor.u32 256, 64
    %267 = vbcast.lane.b32.xlu0 %v264, %s266
    %v268 = vpop.permute.xlu0 %267
    %s270 = sor.u32 256, 72
    %271 = vbcast.lane.b32.xlu0 %v264, %s270
    %v272 = vpop.permute.xlu0 %271
    %s274 = sor.u32 256, 80
    %275 = vbcast.lane.b32.xlu0 %v264, %s274
    %v276 = vpop.permute.xlu0 %275
    %s278 = sor.u32 256, 88
    %279 = vbcast.lane.b32.xlu0 %v264, %s278
    %v280 = vpop.permute.xlu0 %279
    %v281 = vlaneseq
    %v282 = vshrl.u32 %v281, 7
    %v283 = vsub.s32 1, %v282
    %v284 = vrot.slane %v40, %v283
    %s286 = sor.u32 256, 64
    %287 = vbcast.lane.b32.xlu0 %v284, %s286
    %v288 = vpop.permute.xlu0 %287
    %s290 = sor.u32 256, 72
    %291 = vbcast.lane.b32.xlu0 %v284, %s290
    %v292 = vpop.permute.xlu0 %291
    %s294 = sor.u32 256, 80
    %295 = vbcast.lane.b32.xlu0 %v284, %s294
    %v296 = vpop.permute.xlu0 %295
    %s298 = sor.u32 256, 88
    %299 = vbcast.lane.b32.xlu0 %v284, %s298
    %v300 = vpop.permute.xlu0 %299
    %s302 = sor.u32 256, 32
    %303 = vbcast.lane.b32.xlu0 %v264, %s302
    %v304 = vpop.permute.xlu0 %303
    %s306 = sor.u32 256, 40
    %307 = vbcast.lane.b32.xlu0 %v264, %s306
    %v308 = vpop.permute.xlu0 %307
    %s310 = sor.u32 256, 48
    %311 = vbcast.lane.b32.xlu0 %v264, %s310
    %v312 = vpop.permute.xlu0 %311
    %s314 = sor.u32 256, 56
    %315 = vbcast.lane.b32.xlu0 %v264, %s314
    %v316 = vpop.permute.xlu0 %315
    %s318 = sor.u32 256, 32
    %319 = vbcast.lane.b32.xlu0 %v284, %s318
    %v320 = vpop.permute.xlu0 %319
    %s322 = sor.u32 256, 40
    %323 = vbcast.lane.b32.xlu0 %v284, %s322
    %v324 = vpop.permute.xlu0 %323
    %s326 = sor.u32 256, 48
    %327 = vbcast.lane.b32.xlu0 %v284, %s326
    %v328 = vpop.permute.xlu0 %327
    %s330 = sor.u32 256, 56
    %331 = vbcast.lane.b32.xlu0 %v284, %s330
    %v332 = vpop.permute.xlu0 %331
    %v333 = vmul.f32 %v41, %v304
    %v334 = vmul.f32 %v42, %v308
    %v335 = vmul.f32 %v43, %v312
    %v336 = vmul.f32 %v44, %v316
    %v337 = vmul.f32 %v45, %v320
    %v338 = vmul.f32 %v46, %v324
    %v339 = vmul.f32 %v47, %v328
    %v340 = vmul.f32 %v48, %v332
    %v341 = vsub.f32 %v268, %v333
    %v342 = vsub.f32 %v272, %v334
    %v343 = vsub.f32 %v276, %v335
    %v344 = vsub.f32 %v280, %v336
    %v345 = vsub.f32 %v288, %v337
    %v346 = vsub.f32 %v292, %v338
    %v347 = vsub.f32 %v296, %v339
    %v348 = vsub.f32 %v300, %v340
    %v351 = vunpack.c.l.s4 1966171168
    %v352 = vunpack.c.0.s8 %v351
    %v353 = vlaneseq
    %v354 = vshrl.u32 %v353, 7
    %v355 = vsub.s32 %v352, %v354
    %v356 = vrot.slane %v258, %v355
    %v357 = vcombine.high %v356, %v356
    %v359 = vunpack.c.l.s4 1966171168
    %v360 = vunpack.c.0.s8 %v359
    %v361 = vlaneseq
    %v362 = vshrl.u32 %v361, 7
    %v363 = vsub.s32 %v360, %v362
    %v364 = vrot.slane %v356, %v363
    %v366 = vunpack.c.l.s4 1966171168
    %v367 = vunpack.c.0.s8 %v366
    %v368 = vlaneseq
    %v369 = vshrl.u32 %v368, 7
    %v370 = vsub.s32 %v367, %v369
    %v371 = vrot.slane %v357, %v370
    %v372 = vlaneseq
    %v373 = vshrl.u32 %v372, 7
    %v374 = vsub.s32 0, %v373
    %v375 = vrot.slane %v364, %v374
    %v376 = vlaneseq
    %v377 = vshrl.u32 %v376, 7
    %v378 = vsub.s32 0, %v377
    %v379 = vrot.slane %v371, %v378
    %v382 = vmul.f32 %v341, %v375
    %v383 = vmul.f32 %v342, %v375
    %v384 = vmul.f32 %v343, %v375
    %v385 = vmul.f32 %v344, %v375
    %v386 = vmul.f32 %v345, %v379
    %v387 = vmul.f32 %v346, %v379
    %v388 = vmul.f32 %v347, %v379
    %v389 = vmul.f32 %v348, %v379
    %v390 = vadd.f32 %v41, %v382
    %v391 = vadd.f32 %v42, %v383
    %v392 = vadd.f32 %v43, %v384
    %v393 = vadd.f32 %v44, %v385
    %v394 = vadd.f32 %v45, %v386
    %v395 = vadd.f32 %v46, %v387
    %v396 = vadd.f32 %v47, %v388
    %v397 = vadd.f32 %v48, %v389
    %398 = vst [vmem:[#allocation5] sm:$0xff] %v390
    %399 = vst [vmem:[#allocation5 + $0x8] sm:$0xff] %v391
    %400 = vst [vmem:[#allocation5 + $0x10] sm:$0xff] %v392
    %401 = vst [vmem:[#allocation5 + $0x18] sm:$0xff] %v393
    %402 = vst [vmem:[#allocation5 + $0x20] sm:$0xff] %v394
    %403 = vst [vmem:[#allocation5 + $0x28] sm:$0xff] %v395
    %404 = vst [vmem:[#allocation5 + $0x30] sm:$0xff] %v396
    %405 = vst [vmem:[#allocation5 + $0x38] sm:$0xff] %v397
    // Predicated region
    $region18: #{ntm_write_head_rollout.1} parent=1 // pred_check
      _
    $region19: #{ntm_write_head_rollout.1} parent=1 // pred_check_branch
      %407 = sbr.rel (0) target = $region21
    $region20: #{ntm_write_head_rollout.1} parent=1 // pred_region
      %s409 = ssub.s32 32, 32
      %410 = vsyncadd [#allocation4], %s409
      %s412 = sshll.u32 [#allocation3], 4
      %s413 = int_to_ptr.vmem [resolvable:$true] %s412
      %415 = dma.vmem_to_hbm [thread:$0]  %s413, 32, %s3, [#allocation4]
    $region21: #{ntm_write_head_rollout.1} parent=1 // pred_fallthru
      _
    // Predicated region
    $region22: #{ntm_write_head_rollout.1} parent=1 // pred_check
      _
    $region23: #{ntm_write_head_rollout.1} parent=1 // pred_check_branch
      %417 = sbr.rel (0) target = $region25
    $region24: #{ntm_write_head_rollout.1} parent=1 // pred_region
      %s419 = ssub.s32 1024, 1024
      %420 = vsyncadd [#allocation6], %s419
      %s421 = sshll.u32 [#allocation5], 4
      %s422 = int_to_ptr.vmem [resolvable:$true] %s421
      %427 = dma.vmem_to_hbm [thread:$0]  %s422, 1024, %s4, [#allocation6], 128, 128, 8
    $region25: #{ntm_write_head_rollout.1} parent=1 // pred_fallthru
      _
    // Predicated region
    $region26: #{ntm_write_head_rollout.1} parent=1 // pred_check
      _
    $region27: #{ntm_write_head_rollout.1} parent=1 // pred_check_branch
      %429 = sbr.rel (0) target = $region29
    $region28: #{ntm_write_head_rollout.1} parent=1 // pred_region
      %430 = dma.done [#allocation4], 32
    $region29: #{ntm_write_head_rollout.1} parent=1 // pred_fallthru
      _
    // Predicated region
    $region30: #{ntm_write_head_rollout.1} parent=1 // pred_check
      _
    $region31: #{ntm_write_head_rollout.1} parent=1 // pred_check_branch
      %432 = sbr.rel (0) target = $region33
    $region32: #{ntm_write_head_rollout.1} parent=1 // pred_region
      %433 = dma.done [#allocation6], 1024
    $region33: #{ntm_write_head_rollout.1} parent=1 // pred_fallthru
      _
    %434 = vsyncpa [#allocation4], 1
    %435 = vsyncpa [#allocation6], 1

</llo_original>
